<compile_context>
chip_gen: v7x
topology: tpu7x:2x2x1
jax: 0.10.0
libtpu: 0.0.40
codegen_flags: <defaults>
</compile_context>

<pallas_src>
import jax
import jax.numpy as jnp
from jax.experimental import pallas as pl
from jax.experimental.pallas import tpu as pltpu


def _round_up(v, m):
    return (v + m - 1) // m * m


def _dequant(a_i8):
    # int8 -> f32 -> bf16 (two-step conversion; keeps the matmul on the bf16 MXU path).
    return a_i8.astype(jnp.float32).astype(jnp.bfloat16)


# ---------------- kernels ----------------

def _layer1_kernel(a_ref, ascale_ref, xw_ref, b1_ref, wcat_ref, hw_ref, acc_ref):
    """Per (row tile i, K tile k): acc += A_i8 @ XW.
    Last k: HW = relu(scale * acc + b1) @ [W_mu | W_logstd]."""
    k = pl.program_id(1)

    @pl.when(k == 0)
    def _():
        acc_ref[...] = jnp.zeros_like(acc_ref)

    acc_ref[...] += jnp.dot(_dequant(a_ref[...]), xw_ref[...],
                            preferred_element_type=jnp.float32)

    @pl.when(k == pl.num_programs(1) - 1)
    def _():
        # per-row int8 dequant scale, bias, ReLU, fused mu|logstd projection
        h = jnp.maximum(acc_ref[...] * ascale_ref[...] + b1_ref[...], 0.0)
        # TODO(synk): training-mode stochastic dropout (pltpu.prng_*) intentionally
        #             not applied; eval-mode nn.Dropout is the identity.
        hw_ref[...] = jnp.dot(h.astype(jnp.bfloat16), wcat_ref[...],
                              preferred_element_type=jnp.float32).astype(hw_ref.dtype)


def _layer2_kernel(a_ref, ascale_ref, hw_ref, bcat_ref, out_ref, acc_ref):
    """Per (row tile i, K tile k): acc += A_i8 @ HW.
    Last k: OUT = scale * acc + [b_mu | b_logstd]."""
    k = pl.program_id(1)

    @pl.when(k == 0)
    def _():
        acc_ref[...] = jnp.zeros_like(acc_ref)

    acc_ref[...] += jnp.dot(_dequant(a_ref[...]), hw_ref[...],
                            preferred_element_type=jnp.float32)

    @pl.when(k == pl.num_programs(1) - 1)
    def _():
        out_ref[...] = acc_ref[...] * ascale_ref[...] + bcat_ref[...]


# ---------------- wrapper ----------------

def variational_gcn_encoder(x, edge_index, params):
    """x: (N, Cin) float32, edge_index: (2, E) int32. Returns (mu, logstd): (N, Cout)."""
    N, Cin = x.shape
    H = params["w1"].shape[1]
    Cout = params["w_mu"].shape[1]

    # ---- per-generation tiling knobs (plain Python, resolved at trace time) ----
    kind = jax.devices()[0].device_kind.lower()
    # 128-MiB-VMEM generations get the relaxed limit / bigger tiles; anything
    # else (v7x: 64 MiB physical, or unknown) stays conservative.
    big_vmem = any(v in kind for v in ("v2", "v3", "v4", "v5", "v6"))
    vmem_limit = (100 if big_vmem else 48) * 1024 * 1024
    tm_max = 1024 if big_vmem else 512

    Npad = _round_up(N, 128)
    Cinp = _round_up(Cin, 128)
    Hp = _round_up(H, 128)
    Cop = _round_up(2 * Cout, 128)          # lane-dense fused mu|logstd output

    # Row tile: largest power-of-two multiple of 128 (<= tm_max) dividing Npad.
    TM, t = 128, 128
    while t <= tm_max and Npad % t == 0:
        TM = t
        t *= 2
    # v7x: keep grid_rows even so the "parallel" axis shards across both TCs.
    if (not big_vmem) and (Npad // TM) % 2 == 1 and TM >= 256:
        TM //= 2
    # K (contraction) tile: full row when moderate, else capped so VMEM use is
    # O(TM*TK) and independent of N.
    if Npad <= 4096:
        TK = Npad
    else:
        TK = max(c for c in (4096, 2048, 1024, 512, 256, 128) if Npad % c == 0)

    grid_rows = Npad // TM
    grid_k = Npad // TK

    # ---- fused adjacency construction + int8 quantization ----
    src, dst = edge_index[0], edge_index[1]
    idx = jnp.arange(N)
    adj = (jnp.zeros((Npad, Npad), jnp.float32)
           .at[dst, src].add(1.0)       # scatter-add: duplicate edges are summed (PyG)
           .at[idx, idx].add(1.0))      # add self loops
    # TODO(synk): PyG add_remaining_self_loops skips nodes that already have a
    #             self loop; this unconditional add diverges for such graphs.
    deg = jnp.sum(adj, axis=1)                              # padded rows -> deg 0
    dinv = jnp.where(deg > 0, jax.lax.rsqrt(deg), 0.0)
    a_hat = dinv[:, None] * adj * dinv[None, :]             # entries in [0, 1]

    # Symmetric per-row int8 quantization: A_hat ~= a_scale[row] * a_i8.
    row_max = jnp.max(a_hat, axis=1, keepdims=True)
    a_scale = jnp.where(row_max > 0, row_max / 127.0, 1.0)  # (Npad, 1) f32
    a_i8 = jnp.round(a_hat / a_scale).astype(jnp.int8)      # only N^2 array kept

    # ---- small padded operands (MXU / lane-dense shapes) ----
    x_pad = jnp.zeros((Npad, Cinp), jnp.float32).at[:N, :Cin].set(x)
    w1_pad = jnp.zeros((Cinp, Hp), jnp.float32).at[:Cin, :H].set(params["w1"])
    b1_pad = jnp.zeros((1, Hp), jnp.float32).at[0, :H].set(params["b1"])

    w_cat = jnp.concatenate([params["w_mu"], params["w_logstd"]], axis=1)   # (H, 2*Cout)
    b_cat = jnp.concatenate([params["b_mu"], params["b_logstd"]], axis=0)   # (2*Cout,)
    wcat_pad = jnp.zeros((Hp, Cop), jnp.bfloat16).at[:H, :2 * Cout].set(
        w_cat.astype(jnp.bfloat16))
    bcat_pad = jnp.zeros((1, Cop), jnp.float32).at[0, :2 * Cout].set(b_cat)

    # Pre-projection XW = X @ W1: tiny (Npad x 128), left to XLA (no extra kernel).
    xw = jnp.dot(x_pad, w1_pad).astype(jnp.bfloat16)

    cparams = pltpu.CompilerParams(
        dimension_semantics=("parallel", "arbitrary"),
        vmem_limit_bytes=vmem_limit)

    a_spec = pl.BlockSpec((TM, TK), lambda i, k: (i, k))
    ascale_spec = pl.BlockSpec((TM, 1), lambda i, k: (i, 0))

    # ---- pass 1: HW = relu(A_hat @ XW + b1) @ [W_mu | W_logstd] ----
    hw = pl.pallas_call(
        _layer1_kernel,
        out_shape=jax.ShapeDtypeStruct((Npad, Cop), jnp.bfloat16),
        grid=(grid_rows, grid_k),
        in_specs=[a_spec,                                        # A int8 (streamed)
                  ascale_spec,                                   # per-row dequant scale
                  pl.BlockSpec((TK, Hp), lambda i, k: (k, 0)),   # XW
                  pl.BlockSpec((1, Hp), lambda i, k: (0, 0)),    # b1
                  pl.BlockSpec((Hp, Cop), lambda i, k: (0, 0))], # Wcat
        out_specs=pl.BlockSpec((TM, Cop), lambda i, k: (i, 0)),
        scratch_shapes=[pltpu.VMEM((TM, Hp), jnp.float32)],
        compiler_params=cparams,
        cost_estimate=pl.CostEstimate(
            flops=2 * Npad * Npad * Hp + 2 * Npad * Hp * Cop,
            transcendentals=0,
            bytes_accessed=Npad * Npad + 2 * Npad * (Hp + Cop)),
    )(a_i8, a_scale, xw, b1_pad, wcat_pad)

    # ---- pass 2: [mu | logstd] = A_hat @ HW + [b_mu | b_logstd] ----
    out = pl.pallas_call(
        _layer2_kernel,
        out_shape=jax.ShapeDtypeStruct((Npad, Cop), jnp.float32),
        grid=(grid_rows, grid_k),
        in_specs=[a_spec,
                  ascale_spec,
                  pl.BlockSpec((TK, Cop), lambda i, k: (k, 0)),  # HW
                  pl.BlockSpec((1, Cop), lambda i, k: (0, 0))],  # bcat
        out_specs=pl.BlockSpec((TM, Cop), lambda i, k: (i, 0)),
        scratch_shapes=[pltpu.VMEM((TM, Cop), jnp.float32)],
        compiler_params=cparams,
        cost_estimate=pl.CostEstimate(
            flops=2 * Npad * Npad * Cop,
            transcendentals=0,
            bytes_accessed=Npad * Npad + 6 * Npad * Cop),
    )(a_i8, a_scale, hw, bcat_pad)

    mu = out[:N, :Cout]
    logstd = out[:N, Cout:2 * Cout]
    return mu, logstd


# ---------------- params / reference / test ----------------

def init_params(key, in_channels, hidden_size, out_channels):
    """Deterministic glorot-style weights; zero biases (matches GCNConv defaults)."""
    k1, k2, k3 = jax.random.split(key, 3)

    def glorot(k, fan_in, fan_out):
        scale = jnp.sqrt(2.0 / (fan_in + fan_out))
        return jax.random.normal(k, (fan_in, fan_out), jnp.float32) * scale

    return {
        "w1": glorot(k1, in_channels, hidden_size),
        "b1": jnp.zeros((hidden_size,), jnp.float32),
        "w_mu": glorot(k2, hidden_size, out_channels),
        "b_mu": jnp.zeros((out_channels,), jnp.float32),
        "w_logstd": glorot(k3, hidden_size, out_channels),
        "b_logstd": jnp.zeros((out_channels,), jnp.float32),
    }


def _reference(x, edge_index, params):
    """Pure-JAX f32 reference for sanity checking."""
    N = x.shape[0]
    src, dst = edge_index[0], edge_index[1]
    idx = jnp.arange(N)
    adj = (jnp.zeros((N, N), jnp.float32)
           .at[dst, src].add(1.0)
           .at[idx, idx].add(1.0))
    deg = adj.sum(axis=1)
    dinv = jnp.where(deg > 0, 1.0 / jnp.sqrt(deg), 0.0)
    a_hat = dinv[:, None] * adj * dinv[None, :]

    def gcn(h, w, b):
        return a_hat @ (h @ w) + b

    h = jax.nn.relu(gcn(x, params["w1"], params["b1"]))
    return (gcn(h, params["w_mu"], params["b_mu"]),
            gcn(h, params["w_logstd"], params["b_logstd"]))


if __name__ == "__main__":
    # Small, GCN-consistent shapes: 16 nodes, 8 input feats, hidden 32, latent 16.
    N, IN_C, HIDDEN, OUT_C = 16, 8, 32, 16

    key = jax.random.PRNGKey(0)
    kx, kp = jax.random.split(key)

    x = jax.random.normal(kx, (N, IN_C), jnp.float32)

    # Undirected ring graph as edge_index (2, E), no self loops, no duplicates.
    src = jnp.concatenate([jnp.arange(N), (jnp.arange(N) + 1) % N])
    dst = jnp.concatenate([(jnp.arange(N) + 1) % N, jnp.arange(N)])
    edge_index = jnp.stack([src, dst]).astype(jnp.int32)

    params = init_params(kp, IN_C, HIDDEN, OUT_C)

    mu, logstd = jax.jit(variational_gcn_encoder)(x, edge_index, params)
    jax.block_until_ready((mu, logstd))

    mu_ref, logstd_ref = _reference(x, edge_index, params)
    assert mu.shape == (N, OUT_C) and logstd.shape == (N, OUT_C)
    # int8-A (per-row scale) + bf16 activations, f32 accumulation -> loose tol.
    assert jnp.allclose(mu, mu_ref, atol=5e-2, rtol=5e-2), \
        float(jnp.max(jnp.abs(mu - mu_ref)))
    assert jnp.allclose(logstd, logstd_ref, atol=5e-2, rtol=5e-2), \
        float(jnp.max(jnp.abs(logstd - logstd_ref)))

    print("KERNEL_OK")
</pallas_src>

<mosaic_0001>
module attributes {stable_mosaic.version = 11 : i64} {
  func.func private @main(%arg0: i32) attributes {dimension_semantics = [#tpu.dimension_semantics<core_parallel>], iteration_bounds = array<i64: 2>, tpu.core_type = #tpu.core_type<sc_scalar_subcore>, window_params = []} {
    return
  }
}

module attributes {stable_mosaic.version = 11 : i64} {
  func.func private @main(%arg0: i32) attributes {dimension_semantics = [#tpu.dimension_semantics<core_parallel>], iteration_bounds = array<i64: 2>, tpu.core_type = #tpu.core_type<sc_scalar_subcore>, window_params = []} {
    return
  }
}

module attributes {stable_mosaic.version = 11 : i64} {
  func.func @_layer2_kernel(%arg0: i32, %arg1: i32, %arg2: memref<128x128xi8, #tpu.memory_space<vmem>>, %arg3: memref<128x1xf32, #tpu.memory_space<vmem>>, %arg4: memref<128x128xbf16, #tpu.memory_space<vmem>>, %arg5: memref<1x128xf32, #tpu.memory_space<vmem>>, %arg6: memref<128x128xf32, #tpu.memory_space<vmem>>, %arg7: memref<128x128xf32, #tpu.memory_space<vmem>>) attributes {dimension_semantics = [#tpu.dimension_semantics<parallel>, #tpu.dimension_semantics<arbitrary>], iteration_bounds = array<i64: 1, 1>, scalar_prefetch = 0 : i64, scratch_operands = 1 : i64, tpu.core_type = #tpu.core_type<tc>, window_params = [{transform_indices = @transform_0, window_bounds = array<i64: 128, 128>}, {transform_indices = @transform_1, window_bounds = array<i64: 128, 1>}, {transform_indices = @transform_2, window_bounds = array<i64: 128, 128>}, {pipeline_mode = #tpu.pipeline_mode<synchronous>, transform_indices = @transform_3, window_bounds = array<i64: 1, 128>}, {transform_indices = @transform_4, window_bounds = array<i64: 128, 128>}]} {
    %c0_i32 = arith.constant 0 : i32
    %0 = arith.cmpi eq, %arg1, %c0_i32 : i32
    %1 = arith.extui %0 : i1 to i32
    %c0_i32_0 = arith.constant 0 : i32
    %2 = arith.cmpi ne, %1, %c0_i32_0 : i32
    scf.if %2 {
      %cst_10 = arith.constant 0.000000e+00 : f32
      %14 = vector.broadcast %cst_10 : f32 to vector<128x128xf32>
      %c0_11 = arith.constant 0 : index
      %c0_12 = arith.constant 0 : index
      %15 = vector.load %arg7[%c0_11, %c0_12] : memref<128x128xf32, #tpu.memory_space<vmem>>, vector<128x128xf32>
      tpu.vector_store %arg7[%c0_11, %c0_12], %14 {strides = array<i32>} : memref<128x128xf32, #tpu.memory_space<vmem>>, vector<128x128xf32>,
    } else {
    }
    %c0 = arith.constant 0 : index
    %c0_1 = arith.constant 0 : index
    %3 = vector.load %arg7[%c0, %c0_1] : memref<128x128xf32, #tpu.memory_space<vmem>>, vector<128x128xf32>
    %c0_2 = arith.constant 0 : index
    %c0_3 = arith.constant 0 : index
    %4 = vector.load %arg2[%c0_2, %c0_3] : memref<128x128xi8, #tpu.memory_space<vmem>>, vector<128x128xi8>
    %5 = arith.sitofp %4 : vector<128x128xi8> to vector<128x128xf32>
    %6 = arith.truncf %5 : vector<128x128xf32> to vector<128x128xbf16>
    %c0_4 = arith.constant 0 : index
    %c0_5 = arith.constant 0 : index
    %7 = vector.load %arg4[%c0_4, %c0_5] : memref<128x128xbf16, #tpu.memory_space<vmem>>, vector<128x128xbf16>
    %cst = arith.constant dense<0.000000e+00> : vector<128x128xf32>
    %8 = tpu.matmul %6, %7, %cst {dimension_numbers = #tpu.dot_dimension_numbers<[1], [0], [0], [1], [0, 0, 1, 1], [], []>} : vector<128x128xbf16>, vector<128x128xbf16>, vector<128x128xf32> -> vector<128x128xf32>
    %9 = arith.addf %3, %8 : vector<128x128xf32>
    %c0_6 = arith.constant 0 : index
    %c0_7 = arith.constant 0 : index
    %10 = vector.load %arg7[%c0_6, %c0_7] : memref<128x128xf32, #tpu.memory_space<vmem>>, vector<128x128xf32>
    tpu.vector_store %arg7[%c0_6, %c0_7], %9 {strides = array<i32>} : memref<128x128xf32, #tpu.memory_space<vmem>>, vector<128x128xf32>,
    %c0_i32_8 = arith.constant 0 : i32
    %11 = arith.cmpi eq, %arg1, %c0_i32_8 : i32
    %12 = arith.extui %11 : i1 to i32
    %c0_i32_9 = arith.constant 0 : i32
    %13 = arith.cmpi ne, %12, %c0_i32_9 : i32
    scf.if %13 {
      %c0_10 = arith.constant 0 : index
      %c0_11 = arith.constant 0 : index
      %14 = vector.load %arg7[%c0_10, %c0_11] : memref<128x128xf32, #tpu.memory_space<vmem>>, vector<128x128xf32>
      %c0_12 = arith.constant 0 : index
      %c0_13 = arith.constant 0 : index
      %15 = vector.load %arg3[%c0_12, %c0_13] : memref<128x1xf32, #tpu.memory_space<vmem>>, vector<128x1xf32>
      %16 = vector.broadcast %15 : vector<128x1xf32> to vector<128x128xf32>
      %17 = arith.mulf %14, %16 : vector<128x128xf32>
      %c0_14 = arith.constant 0 : index
      %c0_15 = arith.constant 0 : index
      %18 = vector.load %arg5[%c0_14, %c0_15] : memref<1x128xf32, #tpu.memory_space<vmem>>, vector<1x128xf32>
      %19 = vector.broadcast %18 : vector<1x128xf32> to vector<128x128xf32>
      %20 = arith.addf %17, %19 : vector<128x128xf32>
      %c0_16 = arith.constant 0 : index
      %c0_17 = arith.constant 0 : index
      %21 = vector.load %arg6[%c0_16, %c0_17] : memref<128x128xf32, #tpu.memory_space<vmem>>, vector<128x128xf32>
      tpu.vector_store %arg6[%c0_16, %c0_17], %20 {strides = array<i32>} : memref<128x128xf32, #tpu.memory_space<vmem>>, vector<128x128xf32>,
    } else {
    }
    return
  }
  func.func @transform_0(%arg0: i32, %arg1: i32) -> (i32, i32) {
    %c0_i32 = arith.constant 0 : i32
    return %arg0, %arg1 : i32, i32
  }
  func.func @transform_1(%arg0: i32, %arg1: i32) -> (i32, i32) {
    %c0_i32 = arith.constant 0 : i32
    %c0_i32_0 = arith.constant 0 : i32
    return %arg0, %c0_i32 : i32, i32
  }
  func.func @transform_2(%arg0: i32, %arg1: i32) -> (i32, i32) {
    %c0_i32 = arith.constant 0 : i32
    %c0_i32_0 = arith.constant 0 : i32
    return %arg1, %c0_i32 : i32, i32
  }
  func.func @transform_3(%arg0: i32, %arg1: i32) -> (i32, i32) {
    %c0_i32 = arith.constant 0 : i32
    %c0_i32_0 = arith.constant 0 : i32
    %c0_i32_1 = arith.constant 0 : i32
    return %c0_i32, %c0_i32_0 : i32, i32
  }
  func.func @transform_4(%arg0: i32, %arg1: i32) -> (i32, i32) {
    %c0_i32 = arith.constant 0 : i32
    %c0_i32_0 = arith.constant 0 : i32
    return %arg0, %c0_i32 : i32, i32
  }
}

module attributes {stable_mosaic.version = 11 : i64} {
  func.func @_layer1_kernel(%arg0: i32, %arg1: i32, %arg2: memref<128x128xi8, #tpu.memory_space<vmem>>, %arg3: memref<128x1xf32, #tpu.memory_space<vmem>>, %arg4: memref<128x128xbf16, #tpu.memory_space<vmem>>, %arg5: memref<1x128xf32, #tpu.memory_space<vmem>>, %arg6: memref<128x128xbf16, #tpu.memory_space<vmem>>, %arg7: memref<128x128xbf16, #tpu.memory_space<vmem>>, %arg8: memref<128x128xf32, #tpu.memory_space<vmem>>) attributes {dimension_semantics = [#tpu.dimension_semantics<parallel>, #tpu.dimension_semantics<arbitrary>], iteration_bounds = array<i64: 1, 1>, scalar_prefetch = 0 : i64, scratch_operands = 1 : i64, tpu.core_type = #tpu.core_type<tc>, window_params = [{transform_indices = @transform_0, window_bounds = array<i64: 128, 128>}, {transform_indices = @transform_1, window_bounds = array<i64: 128, 1>}, {transform_indices = @transform_2, window_bounds = array<i64: 128, 128>}, {pipeline_mode = #tpu.pipeline_mode<synchronous>, transform_indices = @transform_3, window_bounds = array<i64: 1, 128>}, {pipeline_mode = #tpu.pipeline_mode<synchronous>, transform_indices = @transform_4, window_bounds = array<i64: 128, 128>}, {transform_indices = @transform_5, window_bounds = array<i64: 128, 128>}]} {
    %c0_i32 = arith.constant 0 : i32
    %0 = arith.cmpi eq, %arg1, %c0_i32 : i32
    %1 = arith.extui %0 : i1 to i32
    %c0_i32_0 = arith.constant 0 : i32
    %2 = arith.cmpi ne, %1, %c0_i32_0 : i32
    scf.if %2 {
      %cst_10 = arith.constant 0.000000e+00 : f32
      %14 = vector.broadcast %cst_10 : f32 to vector<128x128xf32>
      %c0_11 = arith.constant 0 : index
      %c0_12 = arith.constant 0 : index
      %15 = vector.load %arg8[%c0_11, %c0_12] : memref<128x128xf32, #tpu.memory_space<vmem>>, vector<128x128xf32>
      tpu.vector_store %arg8[%c0_11, %c0_12], %14 {strides = array<i32>} : memref<128x128xf32, #tpu.memory_space<vmem>>, vector<128x128xf32>,
    } else {
    }
    %c0 = arith.constant 0 : index
    %c0_1 = arith.constant 0 : index
    %3 = vector.load %arg8[%c0, %c0_1] : memref<128x128xf32, #tpu.memory_space<vmem>>, vector<128x128xf32>
    %c0_2 = arith.constant 0 : index
    %c0_3 = arith.constant 0 : index
    %4 = vector.load %arg2[%c0_2, %c0_3] : memref<128x128xi8, #tpu.memory_space<vmem>>, vector<128x128xi8>
    %5 = arith.sitofp %4 : vector<128x128xi8> to vector<128x128xf32>
    %6 = arith.truncf %5 : vector<128x128xf32> to vector<128x128xbf16>
    %c0_4 = arith.constant 0 : index
    %c0_5 = arith.constant 0 : index
    %7 = vector.load %arg4[%c0_4, %c0_5] : memref<128x128xbf16, #tpu.memory_space<vmem>>, vector<128x128xbf16>
    %cst = arith.constant dense<0.000000e+00> : vector<128x128xf32>
    %8 = tpu.matmul %6, %7, %cst {dimension_numbers = #tpu.dot_dimension_numbers<[1], [0], [0], [1], [0, 0, 1, 1], [], []>} : vector<128x128xbf16>, vector<128x128xbf16>, vector<128x128xf32> -> vector<128x128xf32>
    %9 = arith.addf %3, %8 : vector<128x128xf32>
    %c0_6 = arith.constant 0 : index
    %c0_7 = arith.constant 0 : index
    %10 = vector.load %arg8[%c0_6, %c0_7] : memref<128x128xf32, #tpu.memory_space<vmem>>, vector<128x128xf32>
    tpu.vector_store %arg8[%c0_6, %c0_7], %9 {strides = array<i32>} : memref<128x128xf32, #tpu.memory_space<vmem>>, vector<128x128xf32>,
    %c0_i32_8 = arith.constant 0 : i32
    %11 = arith.cmpi eq, %arg1, %c0_i32_8 : i32
    %12 = arith.extui %11 : i1 to i32
    %c0_i32_9 = arith.constant 0 : i32
    %13 = arith.cmpi ne, %12, %c0_i32_9 : i32
    scf.if %13 {
      %c0_10 = arith.constant 0 : index
      %c0_11 = arith.constant 0 : index
      %14 = vector.load %arg8[%c0_10, %c0_11] : memref<128x128xf32, #tpu.memory_space<vmem>>, vector<128x128xf32>
      %c0_12 = arith.constant 0 : index
      %c0_13 = arith.constant 0 : index
      %15 = vector.load %arg3[%c0_12, %c0_13] : memref<128x1xf32, #tpu.memory_space<vmem>>, vector<128x1xf32>
      %16 = vector.broadcast %15 : vector<128x1xf32> to vector<128x128xf32>
      %17 = arith.mulf %14, %16 : vector<128x128xf32>
      %c0_14 = arith.constant 0 : index
      %c0_15 = arith.constant 0 : index
      %18 = vector.load %arg5[%c0_14, %c0_15] : memref<1x128xf32, #tpu.memory_space<vmem>>, vector<1x128xf32>
      %19 = vector.broadcast %18 : vector<1x128xf32> to vector<128x128xf32>
      %20 = arith.addf %17, %19 : vector<128x128xf32>
      %cst_16 = arith.constant 0.000000e+00 : f32
      %21 = vector.broadcast %cst_16 : f32 to vector<128x128xf32>
      %22 = arith.maximumf %20, %21 : vector<128x128xf32>
      %23 = arith.truncf %22 : vector<128x128xf32> to vector<128x128xbf16>
      %c0_17 = arith.constant 0 : index
      %c0_18 = arith.constant 0 : index
      %24 = vector.load %arg6[%c0_17, %c0_18] : memref<128x128xbf16, #tpu.memory_space<vmem>>, vector<128x128xbf16>
      %cst_19 = arith.constant dense<0.000000e+00> : vector<128x128xf32>
      %25 = tpu.matmul %23, %24, %cst_19 {dimension_numbers = #tpu.dot_dimension_numbers<[1], [0], [0], [1], [0, 0, 1, 1], [], []>} : vector<128x128xbf16>, vector<128x128xbf16>, vector<128x128xf32> -> vector<128x128xf32>
      %26 = arith.truncf %25 : vector<128x128xf32> to vector<128x128xbf16>
      %c0_20 = arith.constant 0 : index
      %c0_21 = arith.constant 0 : index
      %27 = vector.load %arg7[%c0_20, %c0_21] : memref<128x128xbf16, #tpu.memory_space<vmem>>, vector<128x128xbf16>
      tpu.vector_store %arg7[%c0_20, %c0_21], %26 {strides = array<i32>} : memref<128x128xbf16, #tpu.memory_space<vmem>>, vector<128x128xbf16>,
    } else {
    }
    return
  }
  func.func @transform_0(%arg0: i32, %arg1: i32) -> (i32, i32) {
    %c0_i32 = arith.constant 0 : i32
    return %arg0, %arg1 : i32, i32
  }
  func.func @transform_1(%arg0: i32, %arg1: i32) -> (i32, i32) {
    %c0_i32 = arith.constant 0 : i32
    %c0_i32_0 = arith.constant 0 : i32
    return %arg0, %c0_i32 : i32, i32
  }
  func.func @transform_2(%arg0: i32, %arg1: i32) -> (i32, i32) {
    %c0_i32 = arith.constant 0 : i32
    %c0_i32_0 = arith.constant 0 : i32
    return %arg1, %c0_i32 : i32, i32
  }
  func.func @transform_3(%arg0: i32, %arg1: i32) -> (i32, i32) {
    %c0_i32 = arith.constant 0 : i32
    %c0_i32_0 = arith.constant 0 : i32
    %c0_i32_1 = arith.constant 0 : i32
    return %c0_i32, %c0_i32_0 : i32, i32
  }
  func.func @transform_4(%arg0: i32, %arg1: i32) -> (i32, i32) {
    %c0_i32 = arith.constant 0 : i32
    %c0_i32_0 = arith.constant 0 : i32
    %c0_i32_1 = arith.constant 0 : i32
    return %c0_i32, %c0_i32_0 : i32, i32
  }
  func.func @transform_5(%arg0: i32, %arg1: i32) -> (i32, i32) {
    %c0_i32 = arith.constant 0 : i32
    %c0_i32_0 = arith.constant 0 : i32
    return %arg0, %c0_i32 : i32, i32
  }
}

</mosaic_0001>

<llo_original>
// kernel: variational_gcn_encoder.3
$region0: #{variational_gcn_encoder.3}
  #allocation0 [shape = 'u32[]', space=smem, size = 0x4, offset = 0x4, fixed_abs, tag = 'smem constant byte address 0x4 - core index']
  #allocation1 [shape = 'u32[144,128]{1,0:T(1,128)}', space=vmem, size = 0x12000, scoped, tag = 'internal scratch']
  #allocation2 [shape = 'f32[128,128]{1,0:T(8,128)}', space=vmem, size = 0x10000, scoped, tag = 'scratch operand']
  %s0 = inlined_call_operand.vmem [shape: s8[128,128], index: 0, kind: input, shape index: {}]
  %s1 = inlined_call_operand.vmem [shape: f32[128,1], index: 1, kind: input, shape index: {}]
  %s2 = inlined_call_operand.vmem [shape: bf16[128,128], index: 2, kind: input, shape index: {}]
  %s3 = inlined_call_operand.vmem [shape: f32[1,128], index: 3, kind: input, shape index: {}]
  %s4 = inlined_call_operand.vmem [shape: f32[128,128], index: 4, kind: output, shape index: {}]
  %s5 = sld [smem:[#allocation0]]
  $region34: #{variational_gcn_encoder.3} parent=0
    _
  %s7 = ssub.s32 1, %s5
  %s8 = scalar_select 0, %s7, %s5
  // Predicated region
  $region2: #{variational_gcn_encoder.3} parent=0 // pred_check
    _
  $region3: #{variational_gcn_encoder.3} parent=0 // pred_check_branch
    %10 = sbr.rel (0) target = $region5
  $region4: #{variational_gcn_encoder.3} parent=0 // pred_region
    _
  $region5: #{variational_gcn_encoder.3} parent=0 // pred_fallthru
    _
  // Predicated region
  $region6: #{variational_gcn_encoder.3} parent=0 // pred_check
    _
  $region7: #{variational_gcn_encoder.3} parent=0 // pred_check_branch
    %12 = sbr.rel (0) target = $region9
  $region8: #{variational_gcn_encoder.3} parent=0 // pred_region
    _
  $region9: #{variational_gcn_encoder.3} parent=0 // pred_fallthru
    _
  // Predicated region
  $region10: #{variational_gcn_encoder.3} parent=0 // pred_check
    _
  $region11: #{variational_gcn_encoder.3} parent=0 // pred_check_branch
    %14 = sbr.rel (0) target = $region13
  $region12: #{variational_gcn_encoder.3} parent=0 // pred_region
    _
  $region13: #{variational_gcn_encoder.3} parent=0 // pred_fallthru
    _
  // Predicated region
  $region14: #{variational_gcn_encoder.3} parent=0 // pred_check
    _
  $region15: #{variational_gcn_encoder.3} parent=0 // pred_check_branch
    %16 = sbr.rel (0) target = $region17
  $region16: #{variational_gcn_encoder.3} parent=0 // pred_region
    _
  $region17: #{variational_gcn_encoder.3} parent=0 // pred_fallthru
    _
  %p18 = scmp.eq.s32.totalorder 0, 0
  // Predicated region
  $region18: #{variational_gcn_encoder.3} parent=0 // pred_check
    %p19 = pneg %p18
  $region19: #{variational_gcn_encoder.3} parent=0 // pred_check_branch
    %21 = sbr.rel (%p19) target = $region21
  $region20: #{variational_gcn_encoder.3} parent=0 // pred_region
    %22 = vst [vmem:[#allocation2] sm:$0xff] 0.0
    %23 = vst [vmem:[#allocation2 + $0x8] sm:$0xff] 0.0
    %24 = vst [vmem:[#allocation2 + $0x10] sm:$0xff] 0.0
    %25 = vst [vmem:[#allocation2 + $0x18] sm:$0xff] 0.0
    %26 = vst [vmem:[#allocation2 + $0x20] sm:$0xff] 0.0
    %27 = vst [vmem:[#allocation2 + $0x28] sm:$0xff] 0.0
    %28 = vst [vmem:[#allocation2 + $0x30] sm:$0xff] 0.0
    %29 = vst [vmem:[#allocation2 + $0x38] sm:$0xff] 0.0
    %30 = vst [vmem:[#allocation2 + $0x40] sm:$0xff] 0.0
    %31 = vst [vmem:[#allocation2 + $0x48] sm:$0xff] 0.0
    %32 = vst [vmem:[#allocation2 + $0x50] sm:$0xff] 0.0
    %33 = vst [vmem:[#allocation2 + $0x58] sm:$0xff] 0.0
    %34 = vst [vmem:[#allocation2 + $0x60] sm:$0xff] 0.0
    %35 = vst [vmem:[#allocation2 + $0x68] sm:$0xff] 0.0
    %36 = vst [vmem:[#allocation2 + $0x70] sm:$0xff] 0.0
    %37 = vst [vmem:[#allocation2 + $0x78] sm:$0xff] 0.0
  $region21: #{variational_gcn_encoder.3} parent=0 // pred_fallthru
    _
  %v38 = vld [vmem:[#allocation2] sm:$0xff]
  %v39 = vld [vmem:[#allocation2 + $0x8] sm:$0xff]
  %v40 = vld [vmem:[#allocation2 + $0x10] sm:$0xff]
  %v41 = vld [vmem:[#allocation2 + $0x18] sm:$0xff]
  %v42 = vld [vmem:[#allocation2 + $0x20] sm:$0xff]
  %v43 = vld [vmem:[#allocation2 + $0x28] sm:$0xff]
  %v44 = vld [vmem:[#allocation2 + $0x30] sm:$0xff]
  %v45 = vld [vmem:[#allocation2 + $0x38] sm:$0xff]
  %v46 = vld [vmem:[#allocation2 + $0x40] sm:$0xff]
  %v47 = vld [vmem:[#allocation2 + $0x48] sm:$0xff]
  %v48 = vld [vmem:[#allocation2 + $0x50] sm:$0xff]
  %v49 = vld [vmem:[#allocation2 + $0x58] sm:$0xff]
  %v50 = vld [vmem:[#allocation2 + $0x60] sm:$0xff]
  %v51 = vld [vmem:[#allocation2 + $0x68] sm:$0xff]
  %v52 = vld [vmem:[#allocation2 + $0x70] sm:$0xff]
  %v53 = vld [vmem:[#allocation2 + $0x78] sm:$0xff]
  %v54 = vld [vmem:[%s0] sm:$0xff]
  %v55 = vld [vmem:[%s0 + $0x8] sm:$0xff]
  %v56 = vld [vmem:[%s0 + $0x10] sm:$0xff]
  %v57 = vld [vmem:[%s0 + $0x18] sm:$0xff]
  %v58 = vunpack.c.l.s8.bf16 %v54
  %v59 = vunpack.c.h.s8.bf16 %v54
  %v60 = vunpack.c.l.s8.bf16 %v55
  %v61 = vunpack.c.h.s8.bf16 %v55
  %v62 = vunpack.c.l.s8.bf16 %v56
  %v63 = vunpack.c.h.s8.bf16 %v56
  %v64 = vunpack.c.l.s8.bf16 %v57
  %v65 = vunpack.c.h.s8.bf16 %v57
  %v66 = vld [vmem:[%s2] sm:$0xf]
  %v67 = vld [vmem:[%s2 + $0x4] sm:$0xf]
  %v68 = vld [vmem:[%s2 + $0x8] sm:$0xf]
  %v69 = vld [vmem:[%s2 + $0xc] sm:$0xf]
  %v70 = vld [vmem:[%s2 + $0x10] sm:$0xf]
  %v71 = vld [vmem:[%s2 + $0x14] sm:$0xf]
  %v72 = vld [vmem:[%s2 + $0x18] sm:$0xf]
  %v73 = vld [vmem:[%s2 + $0x1c] sm:$0xf]
  %v74 = vld [vmem:[%s2 + $0x20] sm:$0xf]
  %v75 = vld [vmem:[%s2 + $0x24] sm:$0xf]
  %v76 = vld [vmem:[%s2 + $0x28] sm:$0xf]
  %v77 = vld [vmem:[%s2 + $0x2c] sm:$0xf]
  %v78 = vld [vmem:[%s2 + $0x30] sm:$0xf]
  %v79 = vld [vmem:[%s2 + $0x34] sm:$0xf]
  %v80 = vld [vmem:[%s2 + $0x38] sm:$0xf]
  %v81 = vld [vmem:[%s2 + $0x3c] sm:$0xf]
  %v98 = vunpack.c.l.b16 %v66
  %v99 = vunpack.c.l.b16 %v67
  %v100 = vunpack.c.l.b16 %v68
  %v101 = vunpack.c.l.b16 %v69
  %v102 = vunpack.c.l.b16 %v70
  %v103 = vunpack.c.l.b16 %v71
  %v104 = vunpack.c.l.b16 %v72
  %v105 = vunpack.c.l.b16 %v73
  %v106 = vunpack.c.l.b16 %v74
  %v107 = vunpack.c.l.b16 %v75
  %v108 = vunpack.c.l.b16 %v76
  %v109 = vunpack.c.l.b16 %v77
  %v110 = vunpack.c.l.b16 %v78
  %v111 = vunpack.c.l.b16 %v79
  %v112 = vunpack.c.l.b16 %v80
  %v113 = vunpack.c.l.b16 %v81
  %v114 = vpack.c.b16 %v99, %v98
  %v115 = vpack.c.b16 %v101, %v100
  %v116 = vpack.c.b16 %v103, %v102
  %v117 = vpack.c.b16 %v105, %v104
  %v118 = vpack.c.b16 %v107, %v106
  %v119 = vpack.c.b16 %v109, %v108
  %v120 = vpack.c.b16 %v111, %v110
  %v121 = vpack.c.b16 %v113, %v112
  %130 = vmatprep.subr.bf16.mxu0 0
  %131 = vmatpush1.bf16.msra.mxu0 %v114
  %132 = vmatprep.subr.bf16.mxu0 0
  %133 = vmatpush1.bf16.msra.mxu0 %v115
  %134 = vmatprep.subr.bf16.mxu0 0
  %135 = vmatpush1.bf16.msra.mxu0 %v116
  %136 = vmatprep.subr.bf16.mxu0 0
  %137 = vmatpush1.bf16.msra.mxu0 %v117
  %138 = vmatprep.subr.bf16.mxu0 0
  %139 = vmatpush1.bf16.msra.mxu0 %v118
  %140 = vmatprep.subr.bf16.mxu0 0
  %141 = vmatpush1.bf16.msra.mxu0 %v119
  %142 = vmatprep.subr.bf16.mxu0 0
  %143 = vmatpush1.bf16.msra.mxu0 %v120
  %144 = vmatprep.subr.bf16.mxu0 0
  %145 = vmatpush1.bf16.msra.mxu0 %v121
  %146 = vmatprep.subr.bf16.mxu0 0
  %147 = vmatpush1.bf16.msra.mxu0 0
  %148 = vmatprep.subr.bf16.mxu0 0
  %149 = vmatpush1.bf16.msra.mxu0 0
  %150 = vmatprep.subr.bf16.mxu0 0
  %151 = vmatpush1.bf16.msra.mxu0 0
  %152 = vmatprep.subr.bf16.mxu0 0
  %153 = vmatpush1.bf16.msra.mxu0 0
  %154 = vmatprep.subr.bf16.mxu0 0
  %155 = vmatpush1.bf16.msra.mxu0 0
  %156 = vmatprep.subr.bf16.mxu0 0
  %157 = vmatpush1.bf16.msra.mxu0 0
  %158 = vmatprep.subr.bf16.mxu0 0
  %159 = vmatpush1.bf16.msra.mxu0 0
  %160 = vmatprep.subr.bf16.mxu0 0
  %161 = vmatpush1.bf16.msra.mxu0 0
  %162 = vmatprep.mubr.bf16.mxu0 0
  %163 = vmatmul.mubr.bf16.gmra.mrb[0].mxu0 %v58
  %v164 = vpop.f32.mrb[0].mxu0
  %v165 = vadd.f32 0.0, %v164
  %v166 = vpop.f32.mrb[0].mxu0
  %v167 = vpop.f32.mrb[0].mxu0
  %v168 = vadd.f32 0.0, %v167
  %v169 = vpop.f32.mrb[0].mxu0
  %170 = vmatprep.mubr.bf16.mxu0 0
  %171 = vmatmul.mubr.bf16.gmra.mrb[0].mxu0 %v59
  %v172 = vpop.f32.mrb[0].mxu0
  %v173 = vadd.f32 0.0, %v172
  %v174 = vpop.f32.mrb[0].mxu0
  %v175 = vpop.f32.mrb[0].mxu0
  %v176 = vadd.f32 0.0, %v175
  %v177 = vpop.f32.mrb[0].mxu0
  %178 = vmatprep.mubr.bf16.mxu0 0
  %179 = vmatmul.mubr.bf16.gmra.mrb[0].mxu0 %v60
  %v180 = vpop.f32.mrb[0].mxu0
  %v181 = vadd.f32 0.0, %v180
  %v182 = vpop.f32.mrb[0].mxu0
  %v183 = vpop.f32.mrb[0].mxu0
  %v184 = vadd.f32 0.0, %v183
  %v185 = vpop.f32.mrb[0].mxu0
  %186 = vmatprep.mubr.bf16.mxu0 0
  %187 = vmatmul.mubr.bf16.gmra.mrb[0].mxu0 %v61
  %v188 = vpop.f32.mrb[0].mxu0
  %v189 = vadd.f32 0.0, %v188
  %v190 = vpop.f32.mrb[0].mxu0
  %v191 = vpop.f32.mrb[0].mxu0
  %v192 = vadd.f32 0.0, %v191
  %v193 = vpop.f32.mrb[0].mxu0
  %194 = vmatprep.mubr.bf16.mxu0 0
  %195 = vmatmul.mubr.bf16.gmra.mrb[0].mxu0 %v62
  %v196 = vpop.f32.mrb[0].mxu0
  %v197 = vadd.f32 0.0, %v196
  %v198 = vpop.f32.mrb[0].mxu0
  %v199 = vpop.f32.mrb[0].mxu0
  %v200 = vadd.f32 0.0, %v199
  %v201 = vpop.f32.mrb[0].mxu0
  %202 = vmatprep.mubr.bf16.mxu0 0
  %203 = vmatmul.mubr.bf16.gmra.mrb[0].mxu0 %v63
  %v204 = vpop.f32.mrb[0].mxu0
  %v205 = vadd.f32 0.0, %v204
  %v206 = vpop.f32.mrb[0].mxu0
  %v207 = vpop.f32.mrb[0].mxu0
  %v208 = vadd.f32 0.0, %v207
  %v209 = vpop.f32.mrb[0].mxu0
  %210 = vmatprep.mubr.bf16.mxu0 0
  %211 = vmatmul.mubr.bf16.gmra.mrb[0].mxu0 %v64
  %v212 = vpop.f32.mrb[0].mxu0
  %v213 = vadd.f32 0.0, %v212
  %v214 = vpop.f32.mrb[0].mxu0
  %v215 = vpop.f32.mrb[0].mxu0
  %v216 = vadd.f32 0.0, %v215
  %v217 = vpop.f32.mrb[0].mxu0
  %218 = vmatprep.mubr.bf16.mxu0 0
  %219 = vmatmul.mubr.bf16.gmra.mrb[0].mxu0 %v65
  %v220 = vpop.f32.mrb[0].mxu0
  %v221 = vadd.f32 0.0, %v220
  %v222 = vpop.f32.mrb[0].mxu0
  %v223 = vpop.f32.mrb[0].mxu0
  %v224 = vadd.f32 0.0, %v223
  %v225 = vpop.f32.mrb[0].mxu0
  %226 = vdwg.mxu0
  %v227 = vadd.f32 %v38, %v165
  %v228 = vadd.f32 %v39, %v168
  %v229 = vadd.f32 %v40, %v173
  %v230 = vadd.f32 %v41, %v176
  %v231 = vadd.f32 %v42, %v181
  %v232 = vadd.f32 %v43, %v184
  %v233 = vadd.f32 %v44, %v189
  %v234 = vadd.f32 %v45, %v192
  %v235 = vadd.f32 %v46, %v197
  %v236 = vadd.f32 %v47, %v200
  %v237 = vadd.f32 %v48, %v205
  %v238 = vadd.f32 %v49, %v208
  %v239 = vadd.f32 %v50, %v213
  %v240 = vadd.f32 %v51, %v216
  %v241 = vadd.f32 %v52, %v221
  %v242 = vadd.f32 %v53, %v224
  %243 = vst [vmem:[#allocation2] sm:$0xff] %v227
  %244 = vst [vmem:[#allocation2 + $0x8] sm:$0xff] %v228
  %245 = vst [vmem:[#allocation2 + $0x10] sm:$0xff] %v229
  %246 = vst [vmem:[#allocation2 + $0x18] sm:$0xff] %v230
  %247 = vst [vmem:[#allocation2 + $0x20] sm:$0xff] %v231
  %248 = vst [vmem:[#allocation2 + $0x28] sm:$0xff] %v232
  %249 = vst [vmem:[#allocation2 + $0x30] sm:$0xff] %v233
  %250 = vst [vmem:[#allocation2 + $0x38] sm:$0xff] %v234
  %251 = vst [vmem:[#allocation2 + $0x40] sm:$0xff] %v235
  %252 = vst [vmem:[#allocation2 + $0x48] sm:$0xff] %v236
  %253 = vst [vmem:[#allocation2 + $0x50] sm:$0xff] %v237
  %254 = vst [vmem:[#allocation2 + $0x58] sm:$0xff] %v238
  %255 = vst [vmem:[#allocation2 + $0x60] sm:$0xff] %v239
  %256 = vst [vmem:[#allocation2 + $0x68] sm:$0xff] %v240
  %257 = vst [vmem:[#allocation2 + $0x70] sm:$0xff] %v241
  %258 = vst [vmem:[#allocation2 + $0x78] sm:$0xff] %v242
  // Predicated region
  $region22: #{variational_gcn_encoder.3} parent=0 // pred_check
    %p259 = pneg %p18
  $region23: #{variational_gcn_encoder.3} parent=0 // pred_check_branch
    %261 = sbr.rel (%p259) target = $region25
  $region24: #{variational_gcn_encoder.3} parent=0 // pred_region
    %v262 = vld [vmem:[#allocation2] sm:$0xff]
    %v263 = vld [vmem:[#allocation2 + $0x8] sm:$0xff]
    %v264 = vld [vmem:[#allocation2 + $0x10] sm:$0xff]
    %v265 = vld [vmem:[#allocation2 + $0x18] sm:$0xff]
    %v266 = vld [vmem:[#allocation2 + $0x20] sm:$0xff]
    %v267 = vld [vmem:[#allocation2 + $0x28] sm:$0xff]
    %v268 = vld [vmem:[#allocation2 + $0x30] sm:$0xff]
    %v269 = vld [vmem:[#allocation2 + $0x38] sm:$0xff]
    %v270 = vld [vmem:[#allocation2 + $0x40] sm:$0xff]
    %v271 = vld [vmem:[#allocation2 + $0x48] sm:$0xff]
    %v272 = vld [vmem:[#allocation2 + $0x50] sm:$0xff]
    %v273 = vld [vmem:[#allocation2 + $0x58] sm:$0xff]
    %v274 = vld [vmem:[#allocation2 + $0x60] sm:$0xff]
    %v275 = vld [vmem:[#allocation2 + $0x68] sm:$0xff]
    %v276 = vld [vmem:[#allocation2 + $0x70] sm:$0xff]
    %v277 = vld [vmem:[#allocation2 + $0x78] sm:$0xff]
    %v278 = vld [vmem:[%s1] sm:$0xff]
    %v279 = vld [vmem:[%s1 + $0x8] sm:$0xff]
    %v280 = vld [vmem:[%s1 + $0x10] sm:$0xff]
    %v281 = vld [vmem:[%s1 + $0x18] sm:$0xff]
    %v282 = vld [vmem:[%s1 + $0x20] sm:$0xff]
    %v283 = vld [vmem:[%s1 + $0x28] sm:$0xff]
    %v284 = vld [vmem:[%s1 + $0x30] sm:$0xff]
    %v285 = vld [vmem:[%s1 + $0x38] sm:$0xff]
    %v286 = vld [vmem:[%s1 + $0x40] sm:$0xff]
    %v287 = vld [vmem:[%s1 + $0x48] sm:$0xff]
    %v288 = vld [vmem:[%s1 + $0x50] sm:$0xff]
    %v289 = vld [vmem:[%s1 + $0x58] sm:$0xff]
    %v290 = vld [vmem:[%s1 + $0x60] sm:$0xff]
    %v291 = vld [vmem:[%s1 + $0x68] sm:$0xff]
    %v292 = vld [vmem:[%s1 + $0x70] sm:$0xff]
    %v293 = vld [vmem:[%s1 + $0x78] sm:$0xff]
    %295 = vset.pattern.permute.xlu0 0
    %296 = vperm.xlu0 %295, %v278
    %v297 = vpop.permute.xlu0 %296
    %300 = vset.pattern.permute.xlu0 0
    %301 = vperm.xlu0 %300, %v279
    %v302 = vpop.permute.xlu0 %301
    %305 = vset.pattern.permute.xlu0 0
    %306 = vperm.xlu0 %305, %v280
    %v307 = vpop.permute.xlu0 %306
    %310 = vset.pattern.permute.xlu0 0
    %311 = vperm.xlu0 %310, %v281
    %v312 = vpop.permute.xlu0 %311
    %315 = vset.pattern.permute.xlu0 0
    %316 = vperm.xlu0 %315, %v282
    %v317 = vpop.permute.xlu0 %316
    %320 = vset.pattern.permute.xlu0 0
    %321 = vperm.xlu0 %320, %v283
    %v322 = vpop.permute.xlu0 %321
    %325 = vset.pattern.permute.xlu0 0
    %326 = vperm.xlu0 %325, %v284
    %v327 = vpop.permute.xlu0 %326
    %330 = vset.pattern.permute.xlu0 0
    %331 = vperm.xlu0 %330, %v285
    %v332 = vpop.permute.xlu0 %331
    %335 = vset.pattern.permute.xlu0 0
    %336 = vperm.xlu0 %335, %v286
    %v337 = vpop.permute.xlu0 %336
    %340 = vset.pattern.permute.xlu0 0
    %341 = vperm.xlu0 %340, %v287
    %v342 = vpop.permute.xlu0 %341
    %345 = vset.pattern.permute.xlu0 0
    %346 = vperm.xlu0 %345, %v288
    %v347 = vpop.permute.xlu0 %346
    %350 = vset.pattern.permute.xlu0 0
    %351 = vperm.xlu0 %350, %v289
    %v352 = vpop.permute.xlu0 %351
    %355 = vset.pattern.permute.xlu0 0
    %356 = vperm.xlu0 %355, %v290
    %v357 = vpop.permute.xlu0 %356
    %360 = vset.pattern.permute.xlu0 0
    %361 = vperm.xlu0 %360, %v291
    %v362 = vpop.permute.xlu0 %361
    %365 = vset.pattern.permute.xlu0 0
    %366 = vperm.xlu0 %365, %v292
    %v367 = vpop.permute.xlu0 %366
    %370 = vset.pattern.permute.xlu0 0
    %371 = vperm.xlu0 %370, %v293
    %v372 = vpop.permute.xlu0 %371
    %v374 = vmul.f32 %v262, %v297
    %v375 = vmul.f32 %v263, %v302
    %v376 = vmul.f32 %v264, %v307
    %v377 = vmul.f32 %v265, %v312
    %v378 = vmul.f32 %v266, %v317
    %v379 = vmul.f32 %v267, %v322
    %v380 = vmul.f32 %v268, %v327
    %v381 = vmul.f32 %v269, %v332
    %v382 = vmul.f32 %v270, %v337
    %v383 = vmul.f32 %v271, %v342
    %v384 = vmul.f32 %v272, %v347
    %v385 = vmul.f32 %v273, %v352
    %v386 = vmul.f32 %v274, %v357
    %v387 = vmul.f32 %v275, %v362
    %v388 = vmul.f32 %v276, %v367
    %v389 = vmul.f32 %v277, %v372
    %v390 = vld [vmem:[%s3] sm:$0x1]
    %v392 = vlaneseq
    %v393 = vshrl.u32 %v392, 7
    %v394 = vsub.s32 0, %v393
    %v395 = vrot.slane %v390, %v394
    %v397 = vadd.f32 %v374, %v395
    %v398 = vadd.f32 %v375, %v395
    %v399 = vadd.f32 %v376, %v395
    %v400 = vadd.f32 %v377, %v395
    %v401 = vadd.f32 %v378, %v395
    %v402 = vadd.f32 %v379, %v395
    %v403 = vadd.f32 %v380, %v395
    %v404 = vadd.f32 %v381, %v395
    %v405 = vadd.f32 %v382, %v395
    %v406 = vadd.f32 %v383, %v395
    %v407 = vadd.f32 %v384, %v395
    %v408 = vadd.f32 %v385, %v395
    %v409 = vadd.f32 %v386, %v395
    %v410 = vadd.f32 %v387, %v395
    %v411 = vadd.f32 %v388, %v395
    %v412 = vadd.f32 %v389, %v395
    %413 = vst [vmem:[%s4] sm:$0xff] %v397
    %414 = vst [vmem:[%s4 + $0x8] sm:$0xff] %v398
    %415 = vst [vmem:[%s4 + $0x10] sm:$0xff] %v399
    %416 = vst [vmem:[%s4 + $0x18] sm:$0xff] %v400
    %417 = vst [vmem:[%s4 + $0x20] sm:$0xff] %v401
    %418 = vst [vmem:[%s4 + $0x28] sm:$0xff] %v402
    %419 = vst [vmem:[%s4 + $0x30] sm:$0xff] %v403
    %420 = vst [vmem:[%s4 + $0x38] sm:$0xff] %v404
    %421 = vst [vmem:[%s4 + $0x40] sm:$0xff] %v405
    %422 = vst [vmem:[%s4 + $0x48] sm:$0xff] %v406
    %423 = vst [vmem:[%s4 + $0x50] sm:$0xff] %v407
    %424 = vst [vmem:[%s4 + $0x58] sm:$0xff] %v408
    %425 = vst [vmem:[%s4 + $0x60] sm:$0xff] %v409
    %426 = vst [vmem:[%s4 + $0x68] sm:$0xff] %v410
    %427 = vst [vmem:[%s4 + $0x70] sm:$0xff] %v411
    %428 = vst [vmem:[%s4 + $0x78] sm:$0xff] %v412
  $region25: #{variational_gcn_encoder.3} parent=0 // pred_fallthru
    _
  // Predicated region
  $region26: #{variational_gcn_encoder.3} parent=0 // pred_check
    _
  $region27: #{variational_gcn_encoder.3} parent=0 // pred_check_branch
    %430 = sbr.rel (0) target = $region29
  $region28: #{variational_gcn_encoder.3} parent=0 // pred_region
    _
  $region29: #{variational_gcn_encoder.3} parent=0 // pred_fallthru
    _
  // Predicated region
  $region30: #{variational_gcn_encoder.3} parent=0 // pred_check
    _
  $region31: #{variational_gcn_encoder.3} parent=0 // pred_check_branch
    %432 = sbr.rel (0) target = $region33
  $region32: #{variational_gcn_encoder.3} parent=0 // pred_region
    _
  $region33: #{variational_gcn_encoder.3} parent=0 // pred_fallthru
    _

// kernel: variational_gcn_encoder.2
$region0: #{variational_gcn_encoder.2}
  #allocation0 [shape = 'u32[]', space=smem, size = 0x4, offset = 0x4, fixed_abs, tag = 'smem constant byte address 0x4 - core index']
  #allocation1 [shape = 'u32[144,128]{1,0:T(1,128)}', space=vmem, size = 0x12000, scoped, tag = 'internal scratch']
  #allocation2 [shape = 'f32[128,128]{1,0:T(8,128)}', space=vmem, size = 0x10000, scoped, tag = 'scratch operand']
  %s0 = inlined_call_operand.vmem [shape: s8[128,128], index: 0, kind: input, shape index: {}]
  %s1 = inlined_call_operand.vmem [shape: f32[128,1], index: 1, kind: input, shape index: {}]
  %s2 = inlined_call_operand.vmem [shape: bf16[128,128], index: 2, kind: input, shape index: {}]
  %s3 = inlined_call_operand.vmem [shape: f32[1,128], index: 3, kind: input, shape index: {}]
  %s4 = inlined_call_operand.vmem [shape: bf16[128,128], index: 4, kind: input, shape index: {}]
  %s5 = inlined_call_operand.vmem [shape: bf16[128,128], index: 5, kind: output, shape index: {}]
  %s6 = sld [smem:[#allocation0]]
  $region38: #{variational_gcn_encoder.2} parent=0
    _
  %s8 = ssub.s32 1, %s6
  %s9 = scalar_select 0, %s8, %s6
  // Predicated region
  $region2: #{variational_gcn_encoder.2} parent=0 // pred_check
    _
  $region3: #{variational_gcn_encoder.2} parent=0 // pred_check_branch
    %11 = sbr.rel (0) target = $region5
  $region4: #{variational_gcn_encoder.2} parent=0 // pred_region
    _
  $region5: #{variational_gcn_encoder.2} parent=0 // pred_fallthru
    _
  // Predicated region
  $region6: #{variational_gcn_encoder.2} parent=0 // pred_check
    _
  $region7: #{variational_gcn_encoder.2} parent=0 // pred_check_branch
    %13 = sbr.rel (0) target = $region9
  $region8: #{variational_gcn_encoder.2} parent=0 // pred_region
    _
  $region9: #{variational_gcn_encoder.2} parent=0 // pred_fallthru
    _
  // Predicated region
  $region10: #{variational_gcn_encoder.2} parent=0 // pred_check
    _
  $region11: #{variational_gcn_encoder.2} parent=0 // pred_check_branch
    %15 = sbr.rel (0) target = $region13
  $region12: #{variational_gcn_encoder.2} parent=0 // pred_region
    _
  $region13: #{variational_gcn_encoder.2} parent=0 // pred_fallthru
    _
  // Predicated region
  $region14: #{variational_gcn_encoder.2} parent=0 // pred_check
    _
  $region15: #{variational_gcn_encoder.2} parent=0 // pred_check_branch
    %17 = sbr.rel (0) target = $region17
  $region16: #{variational_gcn_encoder.2} parent=0 // pred_region
    _
  $region17: #{variational_gcn_encoder.2} parent=0 // pred_fallthru
    _
  // Predicated region
  $region18: #{variational_gcn_encoder.2} parent=0 // pred_check
    _
  $region19: #{variational_gcn_encoder.2} parent=0 // pred_check_branch
    %19 = sbr.rel (0) target = $region21
  $region20: #{variational_gcn_encoder.2} parent=0 // pred_region
    _
  $region21: #{variational_gcn_encoder.2} parent=0 // pred_fallthru
    _
  %p21 = scmp.eq.s32.totalorder 0, 0
  // Predicated region
  $region22: #{variational_gcn_encoder.2} parent=0 // pred_check
    %p22 = pneg %p21
  $region23: #{variational_gcn_encoder.2} parent=0 // pred_check_branch
    %24 = sbr.rel (%p22) target = $region25
  $region24: #{variational_gcn_encoder.2} parent=0 // pred_region
    %25 = vst [vmem:[#allocation2] sm:$0xff] 0.0
    %26 = vst [vmem:[#allocation2 + $0x8] sm:$0xff] 0.0
    %27 = vst [vmem:[#allocation2 + $0x10] sm:$0xff] 0.0
    %28 = vst [vmem:[#allocation2 + $0x18] sm:$0xff] 0.0
    %29 = vst [vmem:[#allocation2 + $0x20] sm:$0xff] 0.0
    %30 = vst [vmem:[#allocation2 + $0x28] sm:$0xff] 0.0
    %31 = vst [vmem:[#allocation2 + $0x30] sm:$0xff] 0.0
    %32 = vst [vmem:[#allocation2 + $0x38] sm:$0xff] 0.0
    %33 = vst [vmem:[#allocation2 + $0x40] sm:$0xff] 0.0
    %34 = vst [vmem:[#allocation2 + $0x48] sm:$0xff] 0.0
    %35 = vst [vmem:[#allocation2 + $0x50] sm:$0xff] 0.0
    %36 = vst [vmem:[#allocation2 + $0x58] sm:$0xff] 0.0
    %37 = vst [vmem:[#allocation2 + $0x60] sm:$0xff] 0.0
    %38 = vst [vmem:[#allocation2 + $0x68] sm:$0xff] 0.0
    %39 = vst [vmem:[#allocation2 + $0x70] sm:$0xff] 0.0
    %40 = vst [vmem:[#allocation2 + $0x78] sm:$0xff] 0.0
  $region25: #{variational_gcn_encoder.2} parent=0 // pred_fallthru
    _
  %v41 = vld [vmem:[#allocation2] sm:$0xff]
  %v42 = vld [vmem:[#allocation2 + $0x8] sm:$0xff]
  %v43 = vld [vmem:[#allocation2 + $0x10] sm:$0xff]
  %v44 = vld [vmem:[#allocation2 + $0x18] sm:$0xff]
  %v45 = vld [vmem:[#allocation2 + $0x20] sm:$0xff]
  %v46 = vld [vmem:[#allocation2 + $0x28] sm:$0xff]
  %v47 = vld [vmem:[#allocation2 + $0x30] sm:$0xff]
  %v48 = vld [vmem:[#allocation2 + $0x38] sm:$0xff]
  %v49 = vld [vmem:[#allocation2 + $0x40] sm:$0xff]
  %v50 = vld [vmem:[#allocation2 + $0x48] sm:$0xff]
  %v51 = vld [vmem:[#allocation2 + $0x50] sm:$0xff]
  %v52 = vld [vmem:[#allocation2 + $0x58] sm:$0xff]
  %v53 = vld [vmem:[#allocation2 + $0x60] sm:$0xff]
  %v54 = vld [vmem:[#allocation2 + $0x68] sm:$0xff]
  %v55 = vld [vmem:[#allocation2 + $0x70] sm:$0xff]
  %v56 = vld [vmem:[#allocation2 + $0x78] sm:$0xff]
  %v57 = vld [vmem:[%s0] sm:$0xff]
  %v58 = vld [vmem:[%s0 + $0x8] sm:$0xff]
  %v59 = vld [vmem:[%s0 + $0x10] sm:$0xff]
  %v60 = vld [vmem:[%s0 + $0x18] sm:$0xff]
  %v61 = vunpack.c.l.s8.bf16 %v57
  %v62 = vunpack.c.h.s8.bf16 %v57
  %v63 = vunpack.c.l.s8.bf16 %v58
  %v64 = vunpack.c.h.s8.bf16 %v58
  %v65 = vunpack.c.l.s8.bf16 %v59
  %v66 = vunpack.c.h.s8.bf16 %v59
  %v67 = vunpack.c.l.s8.bf16 %v60
  %v68 = vunpack.c.h.s8.bf16 %v60
  %v69 = vld [vmem:[%s2] sm:$0xf]
  %v70 = vld [vmem:[%s2 + $0x4] sm:$0xf]
  %v71 = vld [vmem:[%s2 + $0x8] sm:$0xf]
  %v72 = vld [vmem:[%s2 + $0xc] sm:$0xf]
  %v73 = vld [vmem:[%s2 + $0x10] sm:$0xf]
  %v74 = vld [vmem:[%s2 + $0x14] sm:$0xf]
  %v75 = vld [vmem:[%s2 + $0x18] sm:$0xf]
  %v76 = vld [vmem:[%s2 + $0x1c] sm:$0xf]
  %v77 = vld [vmem:[%s2 + $0x20] sm:$0xf]
  %v78 = vld [vmem:[%s2 + $0x24] sm:$0xf]
  %v79 = vld [vmem:[%s2 + $0x28] sm:$0xf]
  %v80 = vld [vmem:[%s2 + $0x2c] sm:$0xf]
  %v81 = vld [vmem:[%s2 + $0x30] sm:$0xf]
  %v82 = vld [vmem:[%s2 + $0x34] sm:$0xf]
  %v83 = vld [vmem:[%s2 + $0x38] sm:$0xf]
  %v84 = vld [vmem:[%s2 + $0x3c] sm:$0xf]
  %v101 = vunpack.c.l.b16 %v69
  %v102 = vunpack.c.l.b16 %v70
  %v103 = vunpack.c.l.b16 %v71
  %v104 = vunpack.c.l.b16 %v72
  %v105 = vunpack.c.l.b16 %v73
  %v106 = vunpack.c.l.b16 %v74
  %v107 = vunpack.c.l.b16 %v75
  %v108 = vunpack.c.l.b16 %v76
  %v109 = vunpack.c.l.b16 %v77
  %v110 = vunpack.c.l.b16 %v78
  %v111 = vunpack.c.l.b16 %v79
  %v112 = vunpack.c.l.b16 %v80
  %v113 = vunpack.c.l.b16 %v81
  %v114 = vunpack.c.l.b16 %v82
  %v115 = vunpack.c.l.b16 %v83
  %v116 = vunpack.c.l.b16 %v84
  %v117 = vpack.c.b16 %v102, %v101
  %v118 = vpack.c.b16 %v104, %v103
  %v119 = vpack.c.b16 %v106, %v105
  %v120 = vpack.c.b16 %v108, %v107
  %v121 = vpack.c.b16 %v110, %v109
  %v122 = vpack.c.b16 %v112, %v111
  %v123 = vpack.c.b16 %v114, %v113
  %v124 = vpack.c.b16 %v116, %v115
  %133 = vmatprep.subr.bf16.mxu0 0
  %134 = vmatpush1.bf16.msra.mxu0 %v117
  %135 = vmatprep.subr.bf16.mxu0 0
  %136 = vmatpush1.bf16.msra.mxu0 %v118
  %137 = vmatprep.subr.bf16.mxu0 0
  %138 = vmatpush1.bf16.msra.mxu0 %v119
  %139 = vmatprep.subr.bf16.mxu0 0
  %140 = vmatpush1.bf16.msra.mxu0 %v120
  %141 = vmatprep.subr.bf16.mxu0 0
  %142 = vmatpush1.bf16.msra.mxu0 %v121
  %143 = vmatprep.subr.bf16.mxu0 0
  %144 = vmatpush1.bf16.msra.mxu0 %v122
  %145 = vmatprep.subr.bf16.mxu0 0
  %146 = vmatpush1.bf16.msra.mxu0 %v123
  %147 = vmatprep.subr.bf16.mxu0 0
  %148 = vmatpush1.bf16.msra.mxu0 %v124
  %149 = vmatprep.subr.bf16.mxu0 0
  %150 = vmatpush1.bf16.msra.mxu0 0
  %151 = vmatprep.subr.bf16.mxu0 0
  %152 = vmatpush1.bf16.msra.mxu0 0
  %153 = vmatprep.subr.bf16.mxu0 0
  %154 = vmatpush1.bf16.msra.mxu0 0
  %155 = vmatprep.subr.bf16.mxu0 0
  %156 = vmatpush1.bf16.msra.mxu0 0
  %157 = vmatprep.subr.bf16.mxu0 0
  %158 = vmatpush1.bf16.msra.mxu0 0
  %159 = vmatprep.subr.bf16.mxu0 0
  %160 = vmatpush1.bf16.msra.mxu0 0
  %161 = vmatprep.subr.bf16.mxu0 0
  %162 = vmatpush1.bf16.msra.mxu0 0
  %163 = vmatprep.subr.bf16.mxu0 0
  %164 = vmatpush1.bf16.msra.mxu0 0
  %165 = vmatprep.mubr.bf16.mxu0 0
  %166 = vmatmul.mubr.bf16.gmra.mrb[0].mxu0 %v61
  %v167 = vpop.f32.mrb[0].mxu0
  %v168 = vadd.f32 0.0, %v167
  %v169 = vpop.f32.mrb[0].mxu0
  %v170 = vpop.f32.mrb[0].mxu0
  %v171 = vadd.f32 0.0, %v170
  %v172 = vpop.f32.mrb[0].mxu0
  %173 = vmatprep.mubr.bf16.mxu0 0
  %174 = vmatmul.mubr.bf16.gmra.mrb[0].mxu0 %v62
  %v175 = vpop.f32.mrb[0].mxu0
  %v176 = vadd.f32 0.0, %v175
  %v177 = vpop.f32.mrb[0].mxu0
  %v178 = vpop.f32.mrb[0].mxu0
  %v179 = vadd.f32 0.0, %v178
  %v180 = vpop.f32.mrb[0].mxu0
  %181 = vmatprep.mubr.bf16.mxu0 0
  %182 = vmatmul.mubr.bf16.gmra.mrb[0].mxu0 %v63
  %v183 = vpop.f32.mrb[0].mxu0
  %v184 = vadd.f32 0.0, %v183
  %v185 = vpop.f32.mrb[0].mxu0
  %v186 = vpop.f32.mrb[0].mxu0
  %v187 = vadd.f32 0.0, %v186
  %v188 = vpop.f32.mrb[0].mxu0
  %189 = vmatprep.mubr.bf16.mxu0 0
  %190 = vmatmul.mubr.bf16.gmra.mrb[0].mxu0 %v64
  %v191 = vpop.f32.mrb[0].mxu0
  %v192 = vadd.f32 0.0, %v191
  %v193 = vpop.f32.mrb[0].mxu0
  %v194 = vpop.f32.mrb[0].mxu0
  %v195 = vadd.f32 0.0, %v194
  %v196 = vpop.f32.mrb[0].mxu0
  %197 = vmatprep.mubr.bf16.mxu0 0
  %198 = vmatmul.mubr.bf16.gmra.mrb[0].mxu0 %v65
  %v199 = vpop.f32.mrb[0].mxu0
  %v200 = vadd.f32 0.0, %v199
  %v201 = vpop.f32.mrb[0].mxu0
  %v202 = vpop.f32.mrb[0].mxu0
  %v203 = vadd.f32 0.0, %v202
  %v204 = vpop.f32.mrb[0].mxu0
  %205 = vmatprep.mubr.bf16.mxu0 0
  %206 = vmatmul.mubr.bf16.gmra.mrb[0].mxu0 %v66
  %v207 = vpop.f32.mrb[0].mxu0
  %v208 = vadd.f32 0.0, %v207
  %v209 = vpop.f32.mrb[0].mxu0
  %v210 = vpop.f32.mrb[0].mxu0
  %v211 = vadd.f32 0.0, %v210
  %v212 = vpop.f32.mrb[0].mxu0
  %213 = vmatprep.mubr.bf16.mxu0 0
  %214 = vmatmul.mubr.bf16.gmra.mrb[0].mxu0 %v67
  %v215 = vpop.f32.mrb[0].mxu0
  %v216 = vadd.f32 0.0, %v215
  %v217 = vpop.f32.mrb[0].mxu0
  %v218 = vpop.f32.mrb[0].mxu0
  %v219 = vadd.f32 0.0, %v218
  %v220 = vpop.f32.mrb[0].mxu0
  %221 = vmatprep.mubr.bf16.mxu0 0
  %222 = vmatmul.mubr.bf16.gmra.mrb[0].mxu0 %v68
  %v223 = vpop.f32.mrb[0].mxu0
  %v224 = vadd.f32 0.0, %v223
  %v225 = vpop.f32.mrb[0].mxu0
  %v226 = vpop.f32.mrb[0].mxu0
  %v227 = vadd.f32 0.0, %v226
  %v228 = vpop.f32.mrb[0].mxu0
  %229 = vdwg.mxu0
  %v230 = vadd.f32 %v41, %v168
  %v231 = vadd.f32 %v42, %v171
  %v232 = vadd.f32 %v43, %v176
  %v233 = vadd.f32 %v44, %v179
  %v234 = vadd.f32 %v45, %v184
  %v235 = vadd.f32 %v46, %v187
  %v236 = vadd.f32 %v47, %v192
  %v237 = vadd.f32 %v48, %v195
  %v238 = vadd.f32 %v49, %v200
  %v239 = vadd.f32 %v50, %v203
  %v240 = vadd.f32 %v51, %v208
  %v241 = vadd.f32 %v52, %v211
  %v242 = vadd.f32 %v53, %v216
  %v243 = vadd.f32 %v54, %v219
  %v244 = vadd.f32 %v55, %v224
  %v245 = vadd.f32 %v56, %v227
  %246 = vst [vmem:[#allocation2] sm:$0xff] %v230
  %247 = vst [vmem:[#allocation2 + $0x8] sm:$0xff] %v231
  %248 = vst [vmem:[#allocation2 + $0x10] sm:$0xff] %v232
  %249 = vst [vmem:[#allocation2 + $0x18] sm:$0xff] %v233
  %250 = vst [vmem:[#allocation2 + $0x20] sm:$0xff] %v234
  %251 = vst [vmem:[#allocation2 + $0x28] sm:$0xff] %v235
  %252 = vst [vmem:[#allocation2 + $0x30] sm:$0xff] %v236
  %253 = vst [vmem:[#allocation2 + $0x38] sm:$0xff] %v237
  %254 = vst [vmem:[#allocation2 + $0x40] sm:$0xff] %v238
  %255 = vst [vmem:[#allocation2 + $0x48] sm:$0xff] %v239
  %256 = vst [vmem:[#allocation2 + $0x50] sm:$0xff] %v240
  %257 = vst [vmem:[#allocation2 + $0x58] sm:$0xff] %v241
  %258 = vst [vmem:[#allocation2 + $0x60] sm:$0xff] %v242
  %259 = vst [vmem:[#allocation2 + $0x68] sm:$0xff] %v243
  %260 = vst [vmem:[#allocation2 + $0x70] sm:$0xff] %v244
  %261 = vst [vmem:[#allocation2 + $0x78] sm:$0xff] %v245
  // Predicated region
  $region26: #{variational_gcn_encoder.2} parent=0 // pred_check
    %p262 = pneg %p21
  $region27: #{variational_gcn_encoder.2} parent=0 // pred_check_branch
    %264 = sbr.rel (%p262) target = $region29
  $region28: #{variational_gcn_encoder.2} parent=0 // pred_region
    %v265 = vld [vmem:[#allocation2] sm:$0xff]
    %v266 = vld [vmem:[#allocation2 + $0x8] sm:$0xff]
    %v267 = vld [vmem:[#allocation2 + $0x10] sm:$0xff]
    %v268 = vld [vmem:[#allocation2 + $0x18] sm:$0xff]
    %v269 = vld [vmem:[#allocation2 + $0x20] sm:$0xff]
    %v270 = vld [vmem:[#allocation2 + $0x28] sm:$0xff]
    %v271 = vld [vmem:[#allocation2 + $0x30] sm:$0xff]
    %v272 = vld [vmem:[#allocation2 + $0x38] sm:$0xff]
    %v273 = vld [vmem:[#allocation2 + $0x40] sm:$0xff]
    %v274 = vld [vmem:[#allocation2 + $0x48] sm:$0xff]
    %v275 = vld [vmem:[#allocation2 + $0x50] sm:$0xff]
    %v276 = vld [vmem:[#allocation2 + $0x58] sm:$0xff]
    %v277 = vld [vmem:[#allocation2 + $0x60] sm:$0xff]
    %v278 = vld [vmem:[#allocation2 + $0x68] sm:$0xff]
    %v279 = vld [vmem:[#allocation2 + $0x70] sm:$0xff]
    %v280 = vld [vmem:[#allocation2 + $0x78] sm:$0xff]
    %v281 = vld [vmem:[%s1] sm:$0xff]
    %v282 = vld [vmem:[%s1 + $0x8] sm:$0xff]
    %v283 = vld [vmem:[%s1 + $0x10] sm:$0xff]
    %v284 = vld [vmem:[%s1 + $0x18] sm:$0xff]
    %v285 = vld [vmem:[%s1 + $0x20] sm:$0xff]
    %v286 = vld [vmem:[%s1 + $0x28] sm:$0xff]
    %v287 = vld [vmem:[%s1 + $0x30] sm:$0xff]
    %v288 = vld [vmem:[%s1 + $0x38] sm:$0xff]
    %v289 = vld [vmem:[%s1 + $0x40] sm:$0xff]
    %v290 = vld [vmem:[%s1 + $0x48] sm:$0xff]
    %v291 = vld [vmem:[%s1 + $0x50] sm:$0xff]
    %v292 = vld [vmem:[%s1 + $0x58] sm:$0xff]
    %v293 = vld [vmem:[%s1 + $0x60] sm:$0xff]
    %v294 = vld [vmem:[%s1 + $0x68] sm:$0xff]
    %v295 = vld [vmem:[%s1 + $0x70] sm:$0xff]
    %v296 = vld [vmem:[%s1 + $0x78] sm:$0xff]
    %298 = vset.pattern.permute.xlu0 0
    %299 = vperm.xlu0 %298, %v281
    %v300 = vpop.permute.xlu0 %299
    %303 = vset.pattern.permute.xlu0 0
    %304 = vperm.xlu0 %303, %v282
    %v305 = vpop.permute.xlu0 %304
    %308 = vset.pattern.permute.xlu0 0
    %309 = vperm.xlu0 %308, %v283
    %v310 = vpop.permute.xlu0 %309
    %313 = vset.pattern.permute.xlu0 0
    %314 = vperm.xlu0 %313, %v284
    %v315 = vpop.permute.xlu0 %314
    %318 = vset.pattern.permute.xlu0 0
    %319 = vperm.xlu0 %318, %v285
    %v320 = vpop.permute.xlu0 %319
    %323 = vset.pattern.permute.xlu0 0
    %324 = vperm.xlu0 %323, %v286
    %v325 = vpop.permute.xlu0 %324
    %328 = vset.pattern.permute.xlu0 0
    %329 = vperm.xlu0 %328, %v287
    %v330 = vpop.permute.xlu0 %329
    %333 = vset.pattern.permute.xlu0 0
    %334 = vperm.xlu0 %333, %v288
    %v335 = vpop.permute.xlu0 %334
    %338 = vset.pattern.permute.xlu0 0
    %339 = vperm.xlu0 %338, %v289
    %v340 = vpop.permute.xlu0 %339
    %343 = vset.pattern.permute.xlu0 0
    %344 = vperm.xlu0 %343, %v290
    %v345 = vpop.permute.xlu0 %344
    %348 = vset.pattern.permute.xlu0 0
    %349 = vperm.xlu0 %348, %v291
    %v350 = vpop.permute.xlu0 %349
    %353 = vset.pattern.permute.xlu0 0
    %354 = vperm.xlu0 %353, %v292
    %v355 = vpop.permute.xlu0 %354
    %358 = vset.pattern.permute.xlu0 0
    %359 = vperm.xlu0 %358, %v293
    %v360 = vpop.permute.xlu0 %359
    %363 = vset.pattern.permute.xlu0 0
    %364 = vperm.xlu0 %363, %v294
    %v365 = vpop.permute.xlu0 %364
    %368 = vset.pattern.permute.xlu0 0
    %369 = vperm.xlu0 %368, %v295
    %v370 = vpop.permute.xlu0 %369
    %373 = vset.pattern.permute.xlu0 0
    %374 = vperm.xlu0 %373, %v296
    %v375 = vpop.permute.xlu0 %374
    %v377 = vmul.f32 %v265, %v300
    %v378 = vmul.f32 %v266, %v305
    %v379 = vmul.f32 %v267, %v310
    %v380 = vmul.f32 %v268, %v315
    %v381 = vmul.f32 %v269, %v320
    %v382 = vmul.f32 %v270, %v325
    %v383 = vmul.f32 %v271, %v330
    %v384 = vmul.f32 %v272, %v335
    %v385 = vmul.f32 %v273, %v340
    %v386 = vmul.f32 %v274, %v345
    %v387 = vmul.f32 %v275, %v350
    %v388 = vmul.f32 %v276, %v355
    %v389 = vmul.f32 %v277, %v360
    %v390 = vmul.f32 %v278, %v365
    %v391 = vmul.f32 %v279, %v370
    %v392 = vmul.f32 %v280, %v375
    %v393 = vld [vmem:[%s3] sm:$0x1]
    %v395 = vlaneseq
    %v396 = vshrl.u32 %v395, 7
    %v397 = vsub.s32 0, %v396
    %v398 = vrot.slane %v393, %v397
    %v400 = vadd.f32 %v377, %v398
    %v401 = vadd.f32 %v378, %v398
    %v402 = vadd.f32 %v379, %v398
    %v403 = vadd.f32 %v380, %v398
    %v404 = vadd.f32 %v381, %v398
    %v405 = vadd.f32 %v382, %v398
    %v406 = vadd.f32 %v383, %v398
    %v407 = vadd.f32 %v384, %v398
    %v408 = vadd.f32 %v385, %v398
    %v409 = vadd.f32 %v386, %v398
    %v410 = vadd.f32 %v387, %v398
    %v411 = vadd.f32 %v388, %v398
    %v412 = vadd.f32 %v389, %v398
    %v413 = vadd.f32 %v390, %v398
    %v414 = vadd.f32 %v391, %v398
    %v415 = vadd.f32 %v392, %v398
    %v416 = vmax.f32 %v400, 0.0
    %v417 = vmax.f32 %v401, 0.0
    %v418 = vmax.f32 %v402, 0.0
    %v419 = vmax.f32 %v403, 0.0
    %v420 = vmax.f32 %v404, 0.0
    %v421 = vmax.f32 %v405, 0.0
    %v422 = vmax.f32 %v406, 0.0
    %v423 = vmax.f32 %v407, 0.0
    %v424 = vmax.f32 %v408, 0.0
    %v425 = vmax.f32 %v409, 0.0
    %v426 = vmax.f32 %v410, 0.0
    %v427 = vmax.f32 %v411, 0.0
    %v428 = vmax.f32 %v412, 0.0
    %v429 = vmax.f32 %v413, 0.0
    %v430 = vmax.f32 %v414, 0.0
    %v431 = vmax.f32 %v415, 0.0
    %v432 = vpack.c.bf16 %v417, %v416
    %v433 = vpack.c.bf16 %v419, %v418
    %v434 = vpack.c.bf16 %v421, %v420
    %v435 = vpack.c.bf16 %v423, %v422
    %v436 = vpack.c.bf16 %v425, %v424
    %v437 = vpack.c.bf16 %v427, %v426
    %v438 = vpack.c.bf16 %v429, %v428
    %v439 = vpack.c.bf16 %v431, %v430
    %v440 = vld [vmem:[%s4] sm:$0xf]
    %v441 = vld [vmem:[%s4 + $0x4] sm:$0xf]
    %v442 = vld [vmem:[%s4 + $0x8] sm:$0xf]
    %v443 = vld [vmem:[%s4 + $0xc] sm:$0xf]
    %v444 = vld [vmem:[%s4 + $0x10] sm:$0xf]
    %v445 = vld [vmem:[%s4 + $0x14] sm:$0xf]
    %v446 = vld [vmem:[%s4 + $0x18] sm:$0xf]
    %v447 = vld [vmem:[%s4 + $0x1c] sm:$0xf]
    %v448 = vld [vmem:[%s4 + $0x20] sm:$0xf]
    %v449 = vld [vmem:[%s4 + $0x24] sm:$0xf]
    %v450 = vld [vmem:[%s4 + $0x28] sm:$0xf]
    %v451 = vld [vmem:[%s4 + $0x2c] sm:$0xf]
    %v452 = vld [vmem:[%s4 + $0x30] sm:$0xf]
    %v453 = vld [vmem:[%s4 + $0x34] sm:$0xf]
    %v454 = vld [vmem:[%s4 + $0x38] sm:$0xf]
    %v455 = vld [vmem:[%s4 + $0x3c] sm:$0xf]
    %v472 = vunpack.c.l.b16 %v440
    %v473 = vunpack.c.l.b16 %v441
    %v474 = vunpack.c.l.b16 %v442
    %v475 = vunpack.c.l.b16 %v443
    %v476 = vunpack.c.l.b16 %v444
    %v477 = vunpack.c.l.b16 %v445
    %v478 = vunpack.c.l.b16 %v446
    %v479 = vunpack.c.l.b16 %v447
    %v480 = vunpack.c.l.b16 %v448
    %v481 = vunpack.c.l.b16 %v449
    %v482 = vunpack.c.l.b16 %v450
    %v483 = vunpack.c.l.b16 %v451
    %v484 = vunpack.c.l.b16 %v452
    %v485 = vunpack.c.l.b16 %v453
    %v486 = vunpack.c.l.b16 %v454
    %v487 = vunpack.c.l.b16 %v455
    %v488 = vpack.c.b16 %v473, %v472
    %v489 = vpack.c.b16 %v475, %v474
    %v490 = vpack.c.b16 %v477, %v476
    %v491 = vpack.c.b16 %v479, %v478
    %v492 = vpack.c.b16 %v481, %v480
    %v493 = vpack.c.b16 %v483, %v482
    %v494 = vpack.c.b16 %v485, %v484
    %v495 = vpack.c.b16 %v487, %v486
    %504 = vmatprep.subr.bf16.mxu0 0
    %505 = vmatpush1.bf16.msra.mxu0 %v488
    %506 = vmatprep.subr.bf16.mxu0 0
    %507 = vmatpush1.bf16.msra.mxu0 %v489
    %508 = vmatprep.subr.bf16.mxu0 0
    %509 = vmatpush1.bf16.msra.mxu0 %v490
    %510 = vmatprep.subr.bf16.mxu0 0
    %511 = vmatpush1.bf16.msra.mxu0 %v491
    %512 = vmatprep.subr.bf16.mxu0 0
    %513 = vmatpush1.bf16.msra.mxu0 %v492
    %514 = vmatprep.subr.bf16.mxu0 0
    %515 = vmatpush1.bf16.msra.mxu0 %v493
    %516 = vmatprep.subr.bf16.mxu0 0
    %517 = vmatpush1.bf16.msra.mxu0 %v494
    %518 = vmatprep.subr.bf16.mxu0 0
    %519 = vmatpush1.bf16.msra.mxu0 %v495
    %520 = vmatprep.subr.bf16.mxu0 0
    %521 = vmatpush1.bf16.msra.mxu0 0
    %522 = vmatprep.subr.bf16.mxu0 0
    %523 = vmatpush1.bf16.msra.mxu0 0
    %524 = vmatprep.subr.bf16.mxu0 0
    %525 = vmatpush1.bf16.msra.mxu0 0
    %526 = vmatprep.subr.bf16.mxu0 0
    %527 = vmatpush1.bf16.msra.mxu0 0
    %528 = vmatprep.subr.bf16.mxu0 0
    %529 = vmatpush1.bf16.msra.mxu0 0
    %530 = vmatprep.subr.bf16.mxu0 0
    %531 = vmatpush1.bf16.msra.mxu0 0
    %532 = vmatprep.subr.bf16.mxu0 0
    %533 = vmatpush1.bf16.msra.mxu0 0
    %534 = vmatprep.subr.bf16.mxu0 0
    %535 = vmatpush1.bf16.msra.mxu0 0
    %536 = vmatprep.mubr.bf16.mxu0 0
    %537 = vmatmul.mubr.bf16.gmra.mrb[0].mxu0 %v432
    %v538 = vpop.f32.mrb[0].mxu0
    %v539 = vadd.f32 0.0, %v538
    %v540 = vpop.f32.mrb[0].mxu0
    %v541 = vpop.f32.mrb[0].mxu0
    %v542 = vadd.f32 0.0, %v541
    %v543 = vpop.f32.mrb[0].mxu0
    %544 = vmatprep.mubr.bf16.mxu0 0
    %545 = vmatmul.mubr.bf16.gmra.mrb[0].mxu0 %v433
    %v546 = vpop.f32.mrb[0].mxu0
    %v547 = vadd.f32 0.0, %v546
    %v548 = vpop.f32.mrb[0].mxu0
    %v549 = vpop.f32.mrb[0].mxu0
    %v550 = vadd.f32 0.0, %v549
    %v551 = vpop.f32.mrb[0].mxu0
    %552 = vmatprep.mubr.bf16.mxu0 0
    %553 = vmatmul.mubr.bf16.gmra.mrb[0].mxu0 %v434
    %v554 = vpop.f32.mrb[0].mxu0
    %v555 = vadd.f32 0.0, %v554
    %v556 = vpop.f32.mrb[0].mxu0
    %v557 = vpop.f32.mrb[0].mxu0
    %v558 = vadd.f32 0.0, %v557
    %v559 = vpop.f32.mrb[0].mxu0
    %560 = vmatprep.mubr.bf16.mxu0 0
    %561 = vmatmul.mubr.bf16.gmra.mrb[0].mxu0 %v435
    %v562 = vpop.f32.mrb[0].mxu0
    %v563 = vadd.f32 0.0, %v562
    %v564 = vpop.f32.mrb[0].mxu0
    %v565 = vpop.f32.mrb[0].mxu0
    %v566 = vadd.f32 0.0, %v565
    %v567 = vpop.f32.mrb[0].mxu0
    %568 = vmatprep.mubr.bf16.mxu0 0
    %569 = vmatmul.mubr.bf16.gmra.mrb[0].mxu0 %v436
    %v570 = vpop.f32.mrb[0].mxu0
    %v571 = vadd.f32 0.0, %v570
    %v572 = vpop.f32.mrb[0].mxu0
    %v573 = vpop.f32.mrb[0].mxu0
    %v574 = vadd.f32 0.0, %v573
    %v575 = vpop.f32.mrb[0].mxu0
    %576 = vmatprep.mubr.bf16.mxu0 0
    %577 = vmatmul.mubr.bf16.gmra.mrb[0].mxu0 %v437
    %v578 = vpop.f32.mrb[0].mxu0
    %v579 = vadd.f32 0.0, %v578
    %v580 = vpop.f32.mrb[0].mxu0
    %v581 = vpop.f32.mrb[0].mxu0
    %v582 = vadd.f32 0.0, %v581
    %v583 = vpop.f32.mrb[0].mxu0
    %584 = vmatprep.mubr.bf16.mxu0 0
    %585 = vmatmul.mubr.bf16.gmra.mrb[0].mxu0 %v438
    %v586 = vpop.f32.mrb[0].mxu0
    %v587 = vadd.f32 0.0, %v586
    %v588 = vpop.f32.mrb[0].mxu0
    %v589 = vpop.f32.mrb[0].mxu0
    %v590 = vadd.f32 0.0, %v589
    %v591 = vpop.f32.mrb[0].mxu0
    %592 = vmatprep.mubr.bf16.mxu0 0
    %593 = vmatmul.mubr.bf16.gmra.mrb[0].mxu0 %v439
    %v594 = vpop.f32.mrb[0].mxu0
    %v595 = vadd.f32 0.0, %v594
    %v596 = vpop.f32.mrb[0].mxu0
    %v597 = vpop.f32.mrb[0].mxu0
    %v598 = vadd.f32 0.0, %v597
    %v599 = vpop.f32.mrb[0].mxu0
    %600 = vdwg.mxu0
    %v601 = vpack.c.bf16 %v542, %v539
    %v602 = vpack.c.bf16 %v550, %v547
    %v603 = vpack.c.bf16 %v558, %v555
    %v604 = vpack.c.bf16 %v566, %v563
    %v605 = vpack.c.bf16 %v574, %v571
    %v606 = vpack.c.bf16 %v582, %v579
    %v607 = vpack.c.bf16 %v590, %v587
    %v608 = vpack.c.bf16 %v598, %v595
    %v617 = vunpack.c.l.b16 %v601
    %v618 = vunpack.c.h.b16 %v601
    %v619 = vunpack.c.l.b16 %v602
    %v620 = vunpack.c.h.b16 %v602
    %v621 = vunpack.c.l.b16 %v603
    %v622 = vunpack.c.h.b16 %v603
    %v623 = vunpack.c.l.b16 %v604
    %v624 = vunpack.c.h.b16 %v604
    %v625 = vunpack.c.l.b16 %v605
    %v626 = vunpack.c.h.b16 %v605
    %v627 = vunpack.c.l.b16 %v606
    %v628 = vunpack.c.h.b16 %v606
    %v629 = vunpack.c.l.b16 %v607
    %v630 = vunpack.c.h.b16 %v607
    %v631 = vunpack.c.l.b16 %v608
    %v632 = vunpack.c.h.b16 %v608
    %v633 = vpack.c.b16 %v617, %v617
    %v634 = vpack.c.b16 %v618, %v618
    %v635 = vpack.c.b16 %v619, %v619
    %v636 = vpack.c.b16 %v620, %v620
    %v637 = vpack.c.b16 %v621, %v621
    %v638 = vpack.c.b16 %v622, %v622
    %v639 = vpack.c.b16 %v623, %v623
    %v640 = vpack.c.b16 %v624, %v624
    %v641 = vpack.c.b16 %v625, %v625
    %v642 = vpack.c.b16 %v626, %v626
    %v643 = vpack.c.b16 %v627, %v627
    %v644 = vpack.c.b16 %v628, %v628
    %v645 = vpack.c.b16 %v629, %v629
    %v646 = vpack.c.b16 %v630, %v630
    %v647 = vpack.c.b16 %v631, %v631
    %v648 = vpack.c.b16 %v632, %v632
    %665 = vst [vmem:[%s5] sm:$0xf] %v633
    %666 = vst [vmem:[%s5 + $0x4] sm:$0xf] %v634
    %667 = vst [vmem:[%s5 + $0x8] sm:$0xf] %v635
    %668 = vst [vmem:[%s5 + $0xc] sm:$0xf] %v636
    %669 = vst [vmem:[%s5 + $0x10] sm:$0xf] %v637
    %670 = vst [vmem:[%s5 + $0x14] sm:$0xf] %v638
    %671 = vst [vmem:[%s5 + $0x18] sm:$0xf] %v639
    %672 = vst [vmem:[%s5 + $0x1c] sm:$0xf] %v640
    %673 = vst [vmem:[%s5 + $0x20] sm:$0xf] %v641
    %674 = vst [vmem:[%s5 + $0x24] sm:$0xf] %v642
    %675 = vst [vmem:[%s5 + $0x28] sm:$0xf] %v643
    %676 = vst [vmem:[%s5 + $0x2c] sm:$0xf] %v644
    %677 = vst [vmem:[%s5 + $0x30] sm:$0xf] %v645
    %678 = vst [vmem:[%s5 + $0x34] sm:$0xf] %v646
    %679 = vst [vmem:[%s5 + $0x38] sm:$0xf] %v647
    %680 = vst [vmem:[%s5 + $0x3c] sm:$0xf] %v648
  $region29: #{variational_gcn_encoder.2} parent=0 // pred_fallthru
    _
  // Predicated region
  $region30: #{variational_gcn_encoder.2} parent=0 // pred_check
    _
  $region31: #{variational_gcn_encoder.2} parent=0 // pred_check_branch
    %682 = sbr.rel (0) target = $region33
  $region32: #{variational_gcn_encoder.2} parent=0 // pred_region
    _
  $region33: #{variational_gcn_encoder.2} parent=0 // pred_fallthru
    _
  // Predicated region
  $region34: #{variational_gcn_encoder.2} parent=0 // pred_check
    _
  $region35: #{variational_gcn_encoder.2} parent=0 // pred_check_branch
    %684 = sbr.rel (0) target = $region37
  $region36: #{variational_gcn_encoder.2} parent=0 // pred_region
    _
  $region37: #{variational_gcn_encoder.2} parent=0 // pred_fallthru
    _

</llo_original>
